<compile_context>
chip_gen: v7x
topology: tpu7x:2x2x1
jax: 0.10.0
libtpu: 0.0.40
codegen_flags: <defaults>
</compile_context>

<pallas_src>
import math

import jax
import jax.numpy as jnp
from jax.experimental import pallas as pl
from jax.experimental.pallas import tpu as pltpu

LANE = 128
LN2 = math.log(2.0)
MAX_KCHUNK = 2048               # cap on 128-lane chunks per grid step
MIN_SPLIT_CHUNKS = 256          # split across 2 cores only if each gets >= this many chunks
TEMP_BYTES_PER_ELEM = 40        # VMEM budget for in-kernel f32 temporaries per block element


def _sublane_multiple(*dtypes):
    """Second-minor block dim must be a multiple of 8 (f32) / 16 (bf16) / 32 (int8)."""
    m = 8
    for dt in dtypes:
        m = max(m, 8 * max(1, 4 // jnp.dtype(dt).itemsize))
    return m


def _vmem_limit_bytes():
    """Generation-aware scoped-VMEM limit: ~3/4 of physical, capped at 96 MiB."""
    cap = 64 * 1024 * 1024                                    # conservative fallback (v7x)
    try:
        cap = int(getattr(pltpu.get_tpu_info(), "vmem_capacity_bytes", cap))
    except Exception:
        pass
    return max(16 * 1024 * 1024, min(cap * 3 // 4, 96 * 1024 * 1024))


def _choose_tiling(bs, nc, itemsize_pred, itemsize_gt, sub_mult, vmem_limit,
                   max_block_chunks, min_split_chunks):
    """Returns (kchunk, nsplit, nsteps, bulk_chunks, k3)."""
    k_needed = -(-nc // LANE)
    # Per-step bytes: double-buffered inputs + elementwise temporaries.
    per_chunk = bs * LANE * (2 * (itemsize_pred + itemsize_gt) + TEMP_BYTES_PER_ELEM)
    budget_chunks = max(sub_mult, int(vmem_limit * 0.8) // per_chunk)
    kchunk = max(sub_mult, (min(max_block_chunks, budget_chunks) // sub_mult) * sub_mult)

    if k_needed <= kchunk:
        # Single-block path: whole problem in one (bs, k3, 128) block; the (cheap, small)
        # zero pad up to the packed-tile sublane multiple is corrected in the wrapper.
        k3 = -(-k_needed // sub_mult) * sub_mult
        return k3, 1, 1, k3, k3

    # Multi-block path: kernel covers a prefix of full blocks (no padding, no copies);
    # the small leftover (< nsplit blocks) is reduced in plain JAX by the wrapper.
    k3 = k_needed
    nsplit = 2 if k3 >= 2 * min_split_chunks else 1   # megacore split decided before sizing
    per_split = k3 // nsplit
    kchunk = min(kchunk, max(sub_mult, (per_split // sub_mult) * sub_mult))
    nsteps = per_split // kchunk
    bulk = nsplit * nsteps * kchunk
    return kchunk, nsplit, nsteps, bulk, k3


def _stats_kernel(pred_ref, gt_ref, acc_ref):
    """Accumulate 8 per-lane statistics into a resident (8,128) slab."""
    @pl.when(pl.program_id(1) == 0)
    def _init():
        acc_ref[...] = jnp.zeros_like(acc_ref)

    pred = pred_ref[...].astype(jnp.float32)        # (bs, kchunk, 128)
    gt = gt_ref[...].astype(jnp.float32)

    # Stable softplus(x) = max(x, 0) + log1p(exp(-|x|)); softplus(-x) derived in wrapper.
    sp_pos = jnp.maximum(pred, 0.0) + jnp.log1p(jnp.exp(-jnp.abs(pred)))

    p0 = pred[0]                                    # batch 0 only (precision/recall/f1)
    g0 = gt[0]
    plab0 = (p0 > 0.0).astype(jnp.float32)

    def rsum(x):   # (bs, kchunk, 128) -> (1, 128)
        return jnp.sum(jnp.sum(x, axis=0), axis=0, keepdims=True)

    def rsum0(x):  # (kchunk, 128) -> (1, 128)
        return jnp.sum(x, axis=0, keepdims=True)

    stacked = jnp.concatenate(
        [
            rsum(gt),            # 0: sum(gt)
            rsum(sp_pos),        # 1: sum(softplus(pred))
            rsum(gt * sp_pos),   # 2: sum(gt * softplus(pred))
            rsum(pred),          # 3: sum(pred)
            rsum(pred * gt),     # 4: sum(pred * gt)
            rsum0(g0 * plab0),   # 5: true positives         (batch 0)
            rsum0(plab0),        # 6: predicted positives    (batch 0)
            rsum0(g0),           # 7: ground-truth positives (batch 0)
        ],
        axis=0,
    )                                               # (8, 128)

    # One unmasked full-tile accumulator update per grid step.
    acc_ref[...] = acc_ref[...] + stacked


def classification_loss(pred, gt, balanced=True, *,
                        _max_block_chunks=MAX_KCHUNK,
                        _min_split_chunks=MIN_SPLIT_CHUNKS):
    """pred, gt: [bs, num_corr]. Returns dict mirroring ClassificationLoss.forward."""
    bs, nc = pred.shape
    assert gt.shape == (bs, nc)

    sub_mult = _sublane_multiple(pred.dtype, gt.dtype)
    vmem_limit = _vmem_limit_bytes()
    kchunk, nsplit, nsteps, bulk, k3 = _choose_tiling(
        bs, nc, pred.dtype.itemsize, gt.dtype.itemsize, sub_mult, vmem_limit,
        _max_block_chunks, _min_split_chunks)

    pad_cols = k3 * LANE - nc
    if pad_cols:
        # Only taken for lane-misaligned num_corr or inputs smaller than one block.
        pad = ((0, 0), (0, pad_cols))
        pred_a = jnp.pad(pred, pad)
        gt_a = jnp.pad(gt, pad)
    else:
        pred_a, gt_a = pred, gt

    # Native-dtype 3-D views (lane = last dim); the f32 cast happens in-register in-kernel.
    pred3 = pred_a.reshape(bs, k3, LANE)
    gt3 = gt_a.reshape(bs, k3, LANE)

    acc = pl.pallas_call(
        _stats_kernel,
        out_shape=jax.ShapeDtypeStruct((nsplit, 8, LANE), jnp.float32),
        grid_spec=pltpu.PrefetchScalarGridSpec(
            num_scalar_prefetch=0,
            grid=(nsplit, nsteps),
            in_specs=[
                pl.BlockSpec((bs, kchunk, LANE), lambda p, s: (0, p * nsteps + s, 0)),
                pl.BlockSpec((bs, kchunk, LANE), lambda p, s: (0, p * nsteps + s, 0)),
            ],
            out_specs=pl.BlockSpec((None, 8, LANE), lambda p, s: (p, 0, 0)),
        ),
        compiler_params=pltpu.CompilerParams(
            dimension_semantics=("parallel", "arbitrary"),
            vmem_limit_bytes=vmem_limit,
        ),
    )(pred3, gt3)

    totals = jnp.sum(acc, axis=(0, 2))              # tiny glue reduce: (nsplit,8,128) -> (8,)

    if bulk < k3:
        # Leftover chunks (< nsplit blocks) not covered by the kernel grid: plain JAX.
        pt = pred3[:, bulk:, :].astype(jnp.float32)
        gl = gt3[:, bulk:, :].astype(jnp.float32)
        sp = jax.nn.softplus(pt)
        plab0 = (pt[0] > 0.0).astype(jnp.float32)
        totals = totals + jnp.stack([
            jnp.sum(gl), jnp.sum(sp), jnp.sum(gl * sp),
            jnp.sum(pt), jnp.sum(pt * gl),
            jnp.sum(gl[0] * plab0), jnp.sum(plab0), jnp.sum(gl[0]),
        ])

    sum_gt, sum_sp, sum_gsp, sum_p, sum_pg, tp0, predpos0, gtpos0 = (
        totals[i] for i in range(8))

    if pad_cols:
        # Zero padding contributes softplus(0) = ln2 per padded element, only to sum_sp.
        sum_sp = sum_sp - jnp.float32(bs * pad_cols * LN2)

    n_total = jnp.float32(bs * nc)
    sum_neg = n_total - sum_gt
    sum_a = sum_gsp - sum_pg    # sum(gt * softplus(-pred))   [softplus(-x) = softplus(x) - x]
    sum_b = sum_sp - sum_gsp    # sum((1 - gt) * softplus(pred))
    sum_pn = sum_p - sum_pg     # sum(pred * (1 - gt))

    # num_pos = relu(sum(gt) - 1) + 1 ; num_neg = relu(sum(1 - gt) - 1) + 1
    num_pos = jnp.maximum(sum_gt - 1.0, 0.0) + 1.0
    num_neg = jnp.maximum(sum_neg - 1.0, 0.0) + 1.0
    pos_weight = num_neg / num_pos

    if balanced:
        loss = (pos_weight * sum_a + sum_b) / n_total
    else:
        loss = (sum_a + sum_b) / n_total

    # sklearn-style precision/recall/f1 on batch element 0 (0.0 on empty denominator).
    precision = jnp.where(predpos0 > 0, tp0 / jnp.maximum(predpos0, 1.0), 0.0)
    recall = jnp.where(gtpos0 > 0, tp0 / jnp.maximum(gtpos0, 1.0), 0.0)
    pr_sum = precision + recall
    f1 = jnp.where(pr_sum > 0, 2.0 * precision * recall / jnp.maximum(pr_sum, 1e-38), 0.0)

    logit_true = sum_pg / jnp.maximum(1.0, sum_gt)
    logit_false = sum_pn / jnp.maximum(1.0, sum_neg)

    return {"loss": loss, "precision": precision, "recall": recall, "f1": f1,
            "logit_true": logit_true, "logit_false": logit_false}


def _reference(pred, gt, balanced=True):
    """Pure-JAX reference mirroring the PyTorch semantics (weight=None path)."""
    pred = pred.astype(jnp.float32)
    gt = gt.astype(jnp.float32)
    num_pos = jnp.maximum(jnp.sum(gt) - 1.0, 0.0) + 1.0
    num_neg = jnp.maximum(jnp.sum(1.0 - gt) - 1.0, 0.0) + 1.0
    sp_pos = jax.nn.softplus(pred)
    sp_neg = jax.nn.softplus(-pred)
    w = num_neg / num_pos if balanced else 1.0
    loss = jnp.mean(w * gt * sp_neg + (1.0 - gt) * sp_pos)
    pred_lab = (pred > 0.0).astype(jnp.float32)
    tp = jnp.sum(gt[0] * pred_lab[0])
    ppos = jnp.sum(pred_lab[0])
    gpos = jnp.sum(gt[0])
    precision = jnp.where(ppos > 0, tp / jnp.maximum(ppos, 1.0), 0.0)
    recall = jnp.where(gpos > 0, tp / jnp.maximum(gpos, 1.0), 0.0)
    f1 = jnp.where(precision + recall > 0,
                   2 * precision * recall / jnp.maximum(precision + recall, 1e-38), 0.0)
    lt = jnp.sum(pred * gt) / jnp.maximum(1.0, jnp.sum(gt))
    lf = jnp.sum(pred * (1.0 - gt)) / jnp.maximum(1.0, jnp.sum(1.0 - gt))
    return {"loss": loss, "precision": precision, "recall": recall, "f1": f1,
            "logit_true": lt, "logit_false": lf}


if __name__ == "__main__":
    key = jax.random.PRNGKey(0)
    cases = [
        # (bs, num_corr, gt dtype, test-path overrides)
        (2, 256, jnp.float32, {}),      # tiny single-block path (padded to sublane multiple)
        (2, 8292, jnp.float32, {}),     # single block + lane-misaligned pad (ln2 correction)
        (1, 2048, jnp.bfloat16, {}),    # native bf16 gt streamed without wrapper upcast
        (2, 4243, jnp.float32,          # multi-block path: 2-way core split + plain-JAX tail
         dict(_max_block_chunks=8, _min_split_chunks=8)),
    ]
    for idx, (bs, num_corr, gt_dtype, kw) in enumerate(cases):
        kp, kg = jax.random.split(jax.random.fold_in(key, idx))
        pred = jax.random.normal(kp, (bs, num_corr), dtype=jnp.float32) * 2.0
        gt = (jax.random.uniform(kg, (bs, num_corr)) < 0.35).astype(gt_dtype)

        out = classification_loss(pred, gt, balanced=True, **kw)
        out = jax.tree_util.tree_map(jax.block_until_ready, out)

        ref = _reference(pred, gt, balanced=True)
        for name in out:
            assert jnp.allclose(out[name], ref[name], rtol=1e-4, atol=1e-4), \
                (idx, name, out[name], ref[name])

    print("KERNEL_OK")
</pallas_src>

<mosaic_0001>
module attributes {stable_mosaic.version = 11 : i64} {
  func.func @_stats_kernel(%arg0: i32, %arg1: i32, %arg2: memref<2x8x128xf32, #tpu.memory_space<vmem>>, %arg3: memref<2x8x128xf32, #tpu.memory_space<vmem>>, %arg4: memref<1x8x128xf32, #tpu.memory_space<vmem>>) attributes {dimension_semantics = [#tpu.dimension_semantics<parallel>, #tpu.dimension_semantics<arbitrary>], iteration_bounds = array<i64: 1, 1>, scalar_prefetch = 0 : i64, scratch_operands = 0 : i64, tpu.core_type = #tpu.core_type<tc>, window_params = [{transform_indices = @transform_0, window_bounds = array<i64: 2, 8, 128>}, {transform_indices = @transform_1, window_bounds = array<i64: 2, 8, 128>}, {transform_indices = @transform_2, window_bounds = array<i64: 1, 8, 128>}]} {
    %c0_i32 = arith.constant 0 : i32
    %0 = arith.cmpi eq, %arg1, %c0_i32 : i32
    %1 = arith.extui %0 : i1 to i32
    %c0_i32_0 = arith.constant 0 : i32
    %2 = arith.cmpi ne, %1, %c0_i32_0 : i32
    scf.if %2 {
      %cst_27 = arith.constant 0.000000e+00 : f32
      %52 = vector.broadcast %cst_27 : f32 to vector<8x128xf32>
      %c0_28 = arith.constant 0 : index
      %c0_29 = arith.constant 0 : index
      %c0_30 = arith.constant 0 : index
      %53 = vector.load %arg4[%c0_28, %c0_29, %c0_30] : memref<1x8x128xf32, #tpu.memory_space<vmem>>, vector<1x8x128xf32>
      %54 = vector.shape_cast %53 : vector<1x8x128xf32> to vector<8x128xf32>
      %55 = vector.shape_cast %52 : vector<8x128xf32> to vector<1x8x128xf32>
      tpu.vector_store %arg4[%c0_28, %c0_29, %c0_30], %55 {strides = array<i32>} : memref<1x8x128xf32, #tpu.memory_space<vmem>>, vector<1x8x128xf32>,
    } else {
    }
    %c0 = arith.constant 0 : index
    %c0_1 = arith.constant 0 : index
    %c0_2 = arith.constant 0 : index
    %3 = vector.load %arg2[%c0, %c0_1, %c0_2] : memref<2x8x128xf32, #tpu.memory_space<vmem>>, vector<2x8x128xf32>
    %c0_3 = arith.constant 0 : index
    %c0_4 = arith.constant 0 : index
    %c0_5 = arith.constant 0 : index
    %4 = vector.load %arg3[%c0_3, %c0_4, %c0_5] : memref<2x8x128xf32, #tpu.memory_space<vmem>>, vector<2x8x128xf32>
    %cst = arith.constant 0.000000e+00 : f32
    %5 = vector.broadcast %cst : f32 to vector<2x8x128xf32>
    %6 = arith.maximumf %3, %5 : vector<2x8x128xf32>
    %7 = math.absf %3 : vector<2x8x128xf32>
    %cst_6 = arith.constant 0.000000e+00 : f32
    %8 = vector.broadcast %cst_6 : f32 to vector<2x8x128xf32>
    %9 = arith.subf %8, %7 : vector<2x8x128xf32>
    %10 = math.exp %9 : vector<2x8x128xf32>
    %11 = math.log1p %10 : vector<2x8x128xf32>
    %12 = arith.addf %6, %11 : vector<2x8x128xf32>
    %13 = vector.extract_strided_slice %3 {offsets = [0, 0, 0], sizes = [1, 8, 128], strides = [1, 1, 1]} : vector<2x8x128xf32> to vector<1x8x128xf32>
    %14 = vector.shape_cast %13 : vector<1x8x128xf32> to vector<8x128xf32>
    %15 = vector.extract_strided_slice %4 {offsets = [0, 0, 0], sizes = [1, 8, 128], strides = [1, 1, 1]} : vector<2x8x128xf32> to vector<1x8x128xf32>
    %16 = vector.shape_cast %15 : vector<1x8x128xf32> to vector<8x128xf32>
    %cst_7 = arith.constant 0.000000e+00 : f32
    %17 = vector.broadcast %cst_7 : f32 to vector<8x128xf32>
    %18 = arith.cmpf ogt, %14, %17 : vector<8x128xf32>
    %19 = arith.extui %18 : vector<8x128xi1> to vector<8x128xi32>
    %20 = arith.sitofp %19 : vector<8x128xi32> to vector<8x128xf32>
    %cst_8 = arith.constant dense<0.000000e+00> : vector<8x128xf32>
    %21 = vector.multi_reduction <add>, %4, %cst_8 [0] : vector<2x8x128xf32> to vector<8x128xf32>
    %cst_9 = arith.constant dense<0.000000e+00> : vector<128xf32>
    %22 = vector.multi_reduction <add>, %21, %cst_9 [0] : vector<8x128xf32> to vector<128xf32>
    %23 = vector.shape_cast %22 : vector<128xf32> to vector<1x128xf32>
    %cst_10 = arith.constant dense<0.000000e+00> : vector<8x128xf32>
    %24 = vector.multi_reduction <add>, %12, %cst_10 [0] : vector<2x8x128xf32> to vector<8x128xf32>
    %cst_11 = arith.constant dense<0.000000e+00> : vector<128xf32>
    %25 = vector.multi_reduction <add>, %24, %cst_11 [0] : vector<8x128xf32> to vector<128xf32>
    %26 = vector.shape_cast %25 : vector<128xf32> to vector<1x128xf32>
    %27 = arith.mulf %4, %12 : vector<2x8x128xf32>
    %cst_12 = arith.constant dense<0.000000e+00> : vector<8x128xf32>
    %28 = vector.multi_reduction <add>, %27, %cst_12 [0] : vector<2x8x128xf32> to vector<8x128xf32>
    %cst_13 = arith.constant dense<0.000000e+00> : vector<128xf32>
    %29 = vector.multi_reduction <add>, %28, %cst_13 [0] : vector<8x128xf32> to vector<128xf32>
    %30 = vector.shape_cast %29 : vector<128xf32> to vector<1x128xf32>
    %cst_14 = arith.constant dense<0.000000e+00> : vector<8x128xf32>
    %31 = vector.multi_reduction <add>, %3, %cst_14 [0] : vector<2x8x128xf32> to vector<8x128xf32>
    %cst_15 = arith.constant dense<0.000000e+00> : vector<128xf32>
    %32 = vector.multi_reduction <add>, %31, %cst_15 [0] : vector<8x128xf32> to vector<128xf32>
    %33 = vector.shape_cast %32 : vector<128xf32> to vector<1x128xf32>
    %34 = arith.mulf %3, %4 : vector<2x8x128xf32>
    %cst_16 = arith.constant dense<0.000000e+00> : vector<8x128xf32>
    %35 = vector.multi_reduction <add>, %34, %cst_16 [0] : vector<2x8x128xf32> to vector<8x128xf32>
    %cst_17 = arith.constant dense<0.000000e+00> : vector<128xf32>
    %36 = vector.multi_reduction <add>, %35, %cst_17 [0] : vector<8x128xf32> to vector<128xf32>
    %37 = vector.shape_cast %36 : vector<128xf32> to vector<1x128xf32>
    %38 = arith.mulf %16, %20 : vector<8x128xf32>
    %cst_18 = arith.constant dense<0.000000e+00> : vector<128xf32>
    %39 = vector.multi_reduction <add>, %38, %cst_18 [0] : vector<8x128xf32> to vector<128xf32>
    %40 = vector.shape_cast %39 : vector<128xf32> to vector<1x128xf32>
    %cst_19 = arith.constant dense<0.000000e+00> : vector<128xf32>
    %41 = vector.multi_reduction <add>, %20, %cst_19 [0] : vector<8x128xf32> to vector<128xf32>
    %42 = vector.shape_cast %41 : vector<128xf32> to vector<1x128xf32>
    %cst_20 = arith.constant dense<0.000000e+00> : vector<128xf32>
    %43 = vector.multi_reduction <add>, %16, %cst_20 [0] : vector<8x128xf32> to vector<128xf32>
    %44 = vector.shape_cast %43 : vector<128xf32> to vector<1x128xf32>
    %45 = tpu.concatenate %23, %26, %30, %33, %37, %40, %42, %44 in 0 : vector<1x128xf32>, vector<1x128xf32>, vector<1x128xf32>, vector<1x128xf32>, vector<1x128xf32>, vector<1x128xf32>, vector<1x128xf32>, vector<1x128xf32> -> vector<8x128xf32>
    %c0_21 = arith.constant 0 : index
    %c0_22 = arith.constant 0 : index
    %c0_23 = arith.constant 0 : index
    %46 = vector.load %arg4[%c0_21, %c0_22, %c0_23] : memref<1x8x128xf32, #tpu.memory_space<vmem>>, vector<1x8x128xf32>
    %47 = vector.shape_cast %46 : vector<1x8x128xf32> to vector<8x128xf32>
    %48 = arith.addf %47, %45 : vector<8x128xf32>
    %c0_24 = arith.constant 0 : index
    %c0_25 = arith.constant 0 : index
    %c0_26 = arith.constant 0 : index
    %49 = vector.load %arg4[%c0_24, %c0_25, %c0_26] : memref<1x8x128xf32, #tpu.memory_space<vmem>>, vector<1x8x128xf32>
    %50 = vector.shape_cast %49 : vector<1x8x128xf32> to vector<8x128xf32>
    %51 = vector.shape_cast %48 : vector<8x128xf32> to vector<1x8x128xf32>
    tpu.vector_store %arg4[%c0_24, %c0_25, %c0_26], %51 {strides = array<i32>} : memref<1x8x128xf32, #tpu.memory_space<vmem>>, vector<1x8x128xf32>,
    return
  }
  func.func @transform_0(%arg0: i32, %arg1: i32) -> (i32, i32, i32) {
    %c1_i32 = arith.constant 1 : i32
    %0 = arith.muli %arg0, %c1_i32 : i32
    %1 = arith.addi %0, %arg1 : i32
    %c0_i32 = arith.constant 0 : i32
    %c0_i32_0 = arith.constant 0 : i32
    %c0_i32_1 = arith.constant 0 : i32
    return %c0_i32, %1, %c0_i32_0 : i32, i32, i32
  }
  func.func @transform_1(%arg0: i32, %arg1: i32) -> (i32, i32, i32) {
    %c1_i32 = arith.constant 1 : i32
    %0 = arith.muli %arg0, %c1_i32 : i32
    %1 = arith.addi %0, %arg1 : i32
    %c0_i32 = arith.constant 0 : i32
    %c0_i32_0 = arith.constant 0 : i32
    %c0_i32_1 = arith.constant 0 : i32
    return %c0_i32, %1, %c0_i32_0 : i32, i32, i32
  }
  func.func @transform_2(%arg0: i32, %arg1: i32) -> (i32, i32, i32) {
    %c0_i32 = arith.constant 0 : i32
    %c0_i32_0 = arith.constant 0 : i32
    %c0_i32_1 = arith.constant 0 : i32
    return %arg0, %c0_i32, %c0_i32_0 : i32, i32, i32
  }
}

</mosaic_0001>

<llo_original>
// kernel: tpu_custom_call.1
$region0: #{tpu_custom_call.1}
  #allocation0 [shape = 'u32[]', space=smem, size = 0x4, offset = 0x4, fixed_abs, tag = 'smem constant byte address 0x4 - core index']
  #allocation1 [shape = 'u32[144,128]{1,0:T(1,128)}', space=vmem, size = 0x12000, scoped, tag = 'internal scratch']
  %s0 = inlined_call_operand.hbm [shape: f32[2,8,128], index: 0, kind: input, shape index: {}]
  %s1 = inlined_call_operand.hbm [shape: f32[2,8,128], index: 1, kind: input, shape index: {}]
  %s2 = inlined_call_operand.hbm [shape: f32[1,8,128], index: 2, kind: output, shape index: {}]
  %s3 = sld [smem:[#allocation0]]
  $region30: #{tpu_custom_call.1} parent=0
    _
  %s5 = ssub.s32 1, %s3
  %s6 = scalar_select 0, %s5, %s3
  $region1: #{tpu_custom_call.1} parent=0
    #allocation2 [shape = 'u8[8192]{0}', space=vmem, size = 0x2000, scoped, tag = 'input window, operand 0, single buffered']
    #allocation3 [shape = 's32[1]{0}', space=sflag, size = 0x4, scoped, tag = 'scoped memory for tpu_custom_call.1']
    #allocation4 [shape = 's32[1]{0}', space=sflag, size = 0x4, scoped, tag = 'scoped memory for tpu_custom_call.1']
    #allocation5 [shape = 'u8[8192]{0}', space=vmem, size = 0x2000, scoped, tag = 'input window, operand 1, single buffered']
    #allocation6 [shape = 's32[1]{0}', space=sflag, size = 0x4, scoped, tag = 'scoped memory for tpu_custom_call.1']
    #allocation7 [shape = 'u8[4096]{0}', space=vmem, size = 0x1000, scoped, tag = 'output window, operand 0, single buffered']
    %7 = vsyncpa [#allocation3], 0
    %8 = vsyncpa [#allocation6], 0
    %9 = vsyncpa [#allocation4], 0
    // Predicated region
    $region2: #{tpu_custom_call.1} parent=1 // pred_check
      _
    $region3: #{tpu_custom_call.1} parent=1 // pred_check_branch
      %11 = sbr.rel (0) target = $region5
    $region4: #{tpu_custom_call.1} parent=1 // pred_region
      %s12 = sadd.s32 0, 0
      %s14 = ssub.s32 256, 256
      %15 = vsyncadd [#allocation3], %s14
      %s16 = smul.addr %s12, 128
      %s17 = scalar_lea.hbm %s0, %s16
      %s18 = sshll.u32 [#allocation2], 4
      %s19 = int_to_ptr.vmem [resolvable:$true] %s18
      %24 = dma.hbm_to_vmem [thread:$0]  %s17, 256, %s19, [#allocation3], 128, 128, 8
    $region5: #{tpu_custom_call.1} parent=1 // pred_fallthru
      _
    // Predicated region
    $region6: #{tpu_custom_call.1} parent=1 // pred_check
      _
    $region7: #{tpu_custom_call.1} parent=1 // pred_check_branch
      %26 = sbr.rel (0) target = $region9
    $region8: #{tpu_custom_call.1} parent=1 // pred_region
      %s27 = sadd.s32 0, 0
      %s29 = ssub.s32 256, 256
      %30 = vsyncadd [#allocation6], %s29
      %s31 = smul.addr %s27, 128
      %s32 = scalar_lea.hbm %s1, %s31
      %s33 = sshll.u32 [#allocation5], 4
      %s34 = int_to_ptr.vmem [resolvable:$true] %s33
      %39 = dma.hbm_to_vmem [thread:$0]  %s32, 256, %s34, [#allocation6], 128, 128, 8
    $region9: #{tpu_custom_call.1} parent=1 // pred_fallthru
      _
    // Predicated region
    $region10: #{tpu_custom_call.1} parent=1 // pred_check
      _
    $region11: #{tpu_custom_call.1} parent=1 // pred_check_branch
      %41 = sbr.rel (0) target = $region13
    $region12: #{tpu_custom_call.1} parent=1 // pred_region
      %42 = dma.done [#allocation3], 256
    $region13: #{tpu_custom_call.1} parent=1 // pred_fallthru
      _
    // Predicated region
    $region14: #{tpu_custom_call.1} parent=1 // pred_check
      _
    $region15: #{tpu_custom_call.1} parent=1 // pred_check_branch
      %44 = sbr.rel (0) target = $region17
    $region16: #{tpu_custom_call.1} parent=1 // pred_region
      %45 = dma.done [#allocation6], 256
    $region17: #{tpu_custom_call.1} parent=1 // pred_fallthru
      _
    %s46 = sadd.s32 0, 0
    %s47 = sadd.s32 0, 0
    %p48 = scmp.eq.s32.totalorder 0, 0
    // Predicated region
    $region18: #{tpu_custom_call.1} parent=1 // pred_check
      %p49 = pneg %p48
    $region19: #{tpu_custom_call.1} parent=1 // pred_check_branch
      %51 = sbr.rel (%p49) target = $region21
    $region20: #{tpu_custom_call.1} parent=1 // pred_region
      %52 = vst [vmem:[#allocation7] sm:$0xff] 0.0
    $region21: #{tpu_custom_call.1} parent=1 // pred_fallthru
      _
    %v53 = vld [vmem:[#allocation2] sm:$0xff]
    %v54 = vld [vmem:[#allocation2 + $0x8] sm:$0xff]
    %v55 = vld [vmem:[#allocation5] sm:$0xff]
    %v56 = vld [vmem:[#allocation5 + $0x8] sm:$0xff]
    %v57 = vmax.f32 %v53, 0.0
    %v58 = vmax.f32 %v54, 0.0
    %v59 = vand.u32 2147483647, %v53
    %v60 = vand.u32 2147483647, %v54
    %v61 = vsub.f32 0.0, %v59
    %v62 = vsub.f32 0.0, %v60
    %v63 = vmul.f32 %v61, 1.442695
    %v64 = vpow.pop %v63
    %v65 = vmul.f32 %v62, 1.442695
    %v66 = vpow.pop %v65
    %v67 = vadd.f32 %v64, 1.0
    %v68 = vlog2.pop %v67
    %v69 = vmul.f32 %v68, 0.6931472
    %v70 = vmul.f32 -0.5, %v64
    %v71 = vadd.f32 %v70, 1.0
    %v72 = vmul.f32 %v71, %v64
    %v73 = vand.u32 2147483647, %v64
    %vm74 = vcmp.lt.f32.partialorder %v73, 0.0004427343
    %v75 = vsel %vm74, %v72, %v69
    %v76 = vadd.f32 %v66, 1.0
    %v77 = vlog2.pop %v76
    %v78 = vmul.f32 %v77, 0.6931472
    %v79 = vmul.f32 -0.5, %v66
    %v80 = vadd.f32 %v79, 1.0
    %v81 = vmul.f32 %v80, %v66
    %v82 = vand.u32 2147483647, %v66
    %vm83 = vcmp.lt.f32.partialorder %v82, 0.0004427343
    %v84 = vsel %vm83, %v81, %v78
    %v85 = vadd.f32 %v57, %v75
    %v86 = vadd.f32 %v58, %v84
    %vm87 = vcmp.gt.f32.partialorder %v53, 0.0
    %v88 = vsel %vm87, 1, 0
    %v89 = vcvt.s32.f32 %v88
    %v90 = vadd.f32 %v55, %v56
    %v91 = vrot.slane %v90, 4
    %v92 = vadd.f32 %v90, %v91
    %v93 = vrot.slane %v92, 2
    %v94 = vadd.f32 %v92, %v93
    %v95 = vrot.slane %v94, 1
    %v96 = vadd.f32 %v94, %v95
    %v97 = vadd.f32 %v85, %v86
    %v98 = vrot.slane %v97, 4
    %v99 = vadd.f32 %v97, %v98
    %v100 = vrot.slane %v99, 2
    %v101 = vadd.f32 %v99, %v100
    %v102 = vrot.slane %v101, 1
    %v103 = vadd.f32 %v101, %v102
    %v104 = vmul.f32 %v55, %v85
    %v105 = vmul.f32 %v56, %v86
    %v106 = vadd.f32 %v104, %v105
    %v107 = vrot.slane %v106, 4
    %v108 = vadd.f32 %v106, %v107
    %v109 = vrot.slane %v108, 2
    %v110 = vadd.f32 %v108, %v109
    %v111 = vrot.slane %v110, 1
    %v112 = vadd.f32 %v110, %v111
    %v113 = vadd.f32 %v53, %v54
    %v114 = vrot.slane %v113, 4
    %v115 = vadd.f32 %v113, %v114
    %v116 = vrot.slane %v115, 2
    %v117 = vadd.f32 %v115, %v116
    %v118 = vrot.slane %v117, 1
    %v119 = vadd.f32 %v117, %v118
    %v120 = vmul.f32 %v53, %v55
    %v121 = vmul.f32 %v54, %v56
    %v122 = vadd.f32 %v120, %v121
    %v123 = vrot.slane %v122, 4
    %v124 = vadd.f32 %v122, %v123
    %v125 = vrot.slane %v124, 2
    %v126 = vadd.f32 %v124, %v125
    %v127 = vrot.slane %v126, 1
    %v128 = vadd.f32 %v126, %v127
    %v129 = vmul.f32 %v55, %v89
    %v130 = vrot.slane %v129, 4
    %v131 = vadd.f32 %v129, %v130
    %v132 = vrot.slane %v131, 2
    %v133 = vadd.f32 %v131, %v132
    %v134 = vrot.slane %v133, 1
    %v135 = vadd.f32 %v133, %v134
    %v136 = vrot.slane %v89, 4
    %v137 = vadd.f32 %v89, %v136
    %v138 = vrot.slane %v137, 2
    %v139 = vadd.f32 %v137, %v138
    %v140 = vrot.slane %v139, 1
    %v141 = vadd.f32 %v139, %v140
    %v142 = vrot.slane %v55, 4
    %v143 = vadd.f32 %v55, %v142
    %v144 = vrot.slane %v143, 2
    %v145 = vadd.f32 %v143, %v144
    %v146 = vrot.slane %v145, 1
    %v147 = vadd.f32 %v145, %v146
    %vm148 = vcmask 1040384
    %v149 = vsel %vm148, %v96, %v103
    %vm150 = vcmask 1041408
    %v151 = vsel %vm150, %v149, %v112
    %vm152 = vcmask 1042432
    %v153 = vsel %vm152, %v151, %v119
    %vm154 = vcmask 1043456
    %v155 = vsel %vm154, %v153, %v128
    %vm156 = vcmask 1044480
    %v157 = vsel %vm156, %v155, %v135
    %vm158 = vcmask 1045504
    %v159 = vsel %vm158, %v157, %v141
    %vm160 = vcmask 1046528
    %v161 = vsel %vm160, %v159, %v147
    %v162 = vld [vmem:[#allocation7] sm:$0xff]
    %v163 = vadd.f32 %v162, %v161
    %164 = vst [vmem:[#allocation7] sm:$0xff] %v163
    // Predicated region
    $region22: #{tpu_custom_call.1} parent=1 // pred_check
      _
    $region23: #{tpu_custom_call.1} parent=1 // pred_check_branch
      %166 = sbr.rel (0) target = $region25
    $region24: #{tpu_custom_call.1} parent=1 // pred_region
      %s168 = ssub.s32 128, 128
      %169 = vsyncadd [#allocation4], %s168
      %s171 = sshll.u32 [#allocation7], 4
      %s172 = int_to_ptr.vmem [resolvable:$true] %s171
      %174 = dma.vmem_to_hbm [thread:$0]  %s172, 128, %s2, [#allocation4]
    $region25: #{tpu_custom_call.1} parent=1 // pred_fallthru
      _
    // Predicated region
    $region26: #{tpu_custom_call.1} parent=1 // pred_check
      _
    $region27: #{tpu_custom_call.1} parent=1 // pred_check_branch
      %176 = sbr.rel (0) target = $region29
    $region28: #{tpu_custom_call.1} parent=1 // pred_region
      %177 = dma.done [#allocation4], 128
    $region29: #{tpu_custom_call.1} parent=1 // pred_fallthru
      _
    %178 = vsyncpa [#allocation3], 1
    %179 = vsyncpa [#allocation6], 1
    %180 = vsyncpa [#allocation4], 1

</llo_original>
